<compile_context>
chip_gen: v7x
topology: tpu7x:2x2x1
jax: 0.10.0
libtpu: 0.0.40
codegen_flags: <defaults>
</compile_context>

<pallas_src>
import functools
import math

import jax
import jax.numpy as jnp
from jax.experimental import pallas as pl
from jax.experimental.pallas import tpu as pltpu


# ---------------------------------------------------------------------------
# Fused per-timestep RAM kernel.
# Weights arrive pre-transposed (in, out) and pre-fused:
#   w34    : (Hg+Hl, Hg+Hl)  rows = [W3; W4],           b34    = b3 + b4
#   w_core : (Hg+Hl+H, H)    rows = [W_ih; W_hh],       b_core = b_ih + b_hh
#   w_heads: (H, 3+num_class) cols = [loc(2) | base(1) | action(num_class)]
# All results are packed into a single lane-dense (tb, slab_w) output slab:
#   [0:H]=h_t, [H:H+2]=mu, [H+2:H+4]=l_t, [H+4]=baseline, [H+5]=log_pi,
#   [H+6:H+6+num_class]=log_probas, rest zero-padded.
# ---------------------------------------------------------------------------
def ram_step_kernel(
    # data
    g_ref, l_ref, noise_ref, h_ref,
    # GlimpseNet params
    w1_ref, b1_ref, w2_ref, b2_ref, w34_ref, b34_ref,
    # fused RNN-cell params
    wc_ref, bc_ref,
    # fused heads
    whd_ref, bhd_ref,
    # output slab
    out_ref,
    # scratch
    u_ref, gh_ref,
    *, std):
  f32 = jnp.float32
  relu = lambda v: jnp.maximum(v, 0.0)

  hg = w1_ref.shape[1]          # glimpse_hidden
  hl = w2_ref.shape[1]          # loc_hidden
  hid = wc_ref.shape[1]         # rnn_hidden
  ncls = whd_ref.shape[1] - 3   # num_class

  # --- GlimpseNet "what" / "where" pre-activations --------------------------
  what_pre = (jnp.dot(g_ref[...], w1_ref[...], preferred_element_type=f32)
              + b1_ref[...])
  # fc2 has a contraction dim of only 2 -> two VPU outer products are cheaper
  # than a K=2 MXU matmul.
  l_in = l_ref[...]                                     # (tb, 2)
  w2 = w2_ref[...]                                      # (2, Hl)
  where_pre = (l_in[:, 0:1] * w2[0:1, :] +
               l_in[:, 1:2] * w2[1:2, :] + b2_ref[...])

  # Pack [relu(what_pre) | relu(where_pre)] into VMEM scratch, one fused matmul
  # replaces fc3 + fc4.
  u_ref[:, 0:hg] = relu(what_pre)
  u_ref[:, hg:hg + hl] = relu(where_pre)
  g_t = relu(jnp.dot(u_ref[...], w34_ref[...], preferred_element_type=f32)
             + b34_ref[...])                            # (tb, Hg+Hl)

  # --- core_network: h_t = relu([g_t | h_prev] @ [W_ih; W_hh] + b) ----------
  gh_ref[:, 0:hg + hl] = g_t
  gh_ref[:, hg + hl:hg + hl + hid] = h_ref[...]
  h_t = relu(jnp.dot(gh_ref[...], wc_ref[...], preferred_element_type=f32)
             + bc_ref[...])                             # (tb, H)

  # --- fused heads (computed while h_t is resident in VMEM) -----------------
  heads = (jnp.dot(h_t, whd_ref[...], preferred_element_type=f32)
           + bhd_ref[...])                              # (tb, 3+num_class)
  mu = jnp.tanh(heads[:, 0:2])                          # LocationNet mean
  baseline = relu(heads[:, 2:3])                        # BaselineNet
  logits = heads[:, 3:]                                 # ActionNet logits

  # Location sampling + Normal(mu, std) log-prob of l_t (RAMNet.step).
  l_t = jnp.tanh(mu + noise_ref[...])
  z = (l_t - mu) * (1.0 / std)
  log_norm = -math.log(std) - 0.5 * math.log(2.0 * math.pi)
  log_pi = jnp.sum(-0.5 * z * z + log_norm, axis=1, keepdims=True)

  # ActionNet: numerically-stable log_softmax over classes.
  m = jnp.max(logits, axis=1, keepdims=True)
  shifted = logits - m
  lse = jnp.log(jnp.sum(jnp.exp(shifted), axis=1, keepdims=True))

  # --- single lane-packed output slab ---------------------------------------
  out_ref[...] = jnp.zeros_like(out_ref)
  out_ref[:, 0:hid] = h_t
  out_ref[:, hid:hid + 2] = mu
  out_ref[:, hid + 2:hid + 4] = l_t
  out_ref[:, hid + 4:hid + 5] = baseline
  out_ref[:, hid + 5:hid + 6] = log_pi
  out_ref[:, hid + 6:hid + 6 + ncls] = shifted - lse


_PARAM_ORDER = ("w1", "b1", "w2", "b2", "w34", "b34",
                "w_core", "b_core", "w_heads", "b_heads")


def ram_step(glimpse, l_t, noise_t, h_prev, kparams, *, std):
  """One fused RAM timestep. Returns (h_t, mu, l_next, baseline, log_pi, log_probas)."""
  batch = glimpse.shape[0]
  hid = h_prev.shape[1]
  hg = kparams["w1"].shape[1]
  hl = kparams["w2"].shape[1]
  num_class = kparams["w_heads"].shape[1] - 3
  used_w = hid + 6 + num_class
  slab_w = ((used_w + 127) // 128) * 128                # lane-dense output width

  # Batch tile: multiple of 8 sublanes, capped at 512 rows; tiny batches are
  # padded up so vregs / MXU rows are not 2/8 occupied.
  tb = min(512, ((max(batch, 1) + 7) // 8) * 8)
  bp = ((batch + tb - 1) // tb) * tb
  pad = bp - batch
  if pad:
    pad_rows = lambda a: jnp.pad(a, ((0, pad), (0, 0)))
    glimpse_in, l_in, noise_in, h_in = map(
        pad_rows, (glimpse, l_t, noise_t, h_prev))
  else:
    glimpse_in, l_in, noise_in, h_in = glimpse, l_t, noise_t, h_prev

  data = (glimpse_in, l_in, noise_in, h_in)
  params = tuple(kparams[k] for k in _PARAM_ORDER)

  grid = (bp // tb,)
  in_specs = [pl.BlockSpec((tb, a.shape[1]), lambda i: (i, 0)) for a in data]
  # Constant index_map -> weights stay resident in VMEM across batch tiles.
  in_specs += [pl.BlockSpec(p.shape, lambda i: (0, 0)) for p in params]
  out_spec = pl.BlockSpec((tb, slab_w), lambda i: (i, 0))

  slab = pl.pallas_call(
      functools.partial(ram_step_kernel, std=std),
      out_shape=jax.ShapeDtypeStruct((bp, slab_w), jnp.float32),
      grid=grid,
      in_specs=in_specs,
      out_specs=out_spec,
      scratch_shapes=[pltpu.VMEM((tb, hg + hl), jnp.float32),
                      pltpu.VMEM((tb, hg + hl + hid), jnp.float32)],
      compiler_params=pltpu.CompilerParams(
          dimension_semantics=("parallel",)),
  )(*data, *params)

  h_t = slab[:batch, 0:hid]
  mu = slab[:batch, hid:hid + 2]
  l_new = slab[:batch, hid + 2:hid + 4]
  baseline = slab[:batch, hid + 4:hid + 5]
  log_pi = slab[:batch, hid + 5:hid + 6]
  log_probas = slab[:batch, hid + 6:hid + 6 + num_class]
  return h_t, mu, l_new, baseline, log_pi, log_probas


# ---------------------------------------------------------------------------
# retina.foveate in plain JAX (data-dependent patch gather + average pooling).
# ---------------------------------------------------------------------------
def extract_patch(x, l, size):
  _, chans, height, width = x.shape
  img_shape = jnp.array([height, width], jnp.float32)
  coords = (0.5 * ((l + 1.0) * img_shape)).astype(jnp.int32)    # (B, 2)
  pad = size // 2
  xp = jnp.pad(x, ((0, 0), (0, 0), (pad, pad), (pad, pad)))

  def one(img, from_x, from_y):
    return jax.lax.dynamic_slice(img, (0, from_y, from_x), (chans, size, size))

  return jax.vmap(one)(xp, coords[:, 0], coords[:, 1])


def foveate(x, l, *, patch_size, num_patches, scale):
  batch = x.shape[0]
  patches = []
  size = patch_size
  for _ in range(num_patches):
    patches.append(extract_patch(x, l, size))
    size = int(scale * size)
  for i in range(1, len(patches)):
    p = patches[i]
    b, c, s, _ = p.shape
    k = s // patch_size
    patches[i] = p.reshape(b, c, patch_size, k, patch_size, k).mean(axis=(3, 5))
  glimpse = jnp.concatenate(patches, axis=1)    # (B, C*num_patches, ps, ps)
  return glimpse.reshape(batch, -1)


# ---------------------------------------------------------------------------
# RAMNet.forward: Python loop over glimpses, one fused Pallas kernel per step.
# ---------------------------------------------------------------------------
def ram_forward(x, l_0, noise, kparams, *, num_glimpses, patch_size,
                num_patches, scale, std, rnn_hidden):
  batch = x.shape[0]
  h_t = jnp.zeros((batch, rnn_hidden), jnp.float32)
  l_t = l_0
  locs, baselines, log_pis = [], [], []
  log_probas = None
  for t in range(num_glimpses):
    glimpse = foveate(x, l_t, patch_size=patch_size,
                      num_patches=num_patches, scale=scale)
    h_t, _mu, l_t, b_t, lp_t, log_probas = ram_step(
        glimpse, l_t, noise[t], h_t, kparams, std=std)
    locs.append(l_t)
    baselines.append(b_t[:, 0])
    log_pis.append(lp_t[:, 0])
  baselines = jnp.stack(baselines, axis=1)      # (B, num_glimpses)
  log_pis = jnp.stack(log_pis, axis=1)          # (B, num_glimpses)
  return locs, baselines, log_pis, log_probas


# ---------------------------------------------------------------------------
# Parameters (synthetic nn.Linear-style init, stored pre-transposed ONCE).
# ---------------------------------------------------------------------------
def linear_params(key, fan_in, fan_out):
  kw, kb = jax.random.split(key)
  bound = 1.0 / math.sqrt(fan_in)
  w = jax.random.uniform(kw, (fan_in, fan_out), jnp.float32, -bound, bound)
  b = jax.random.uniform(kb, (1, fan_out), jnp.float32, -bound, bound)
  return w, b


def init_params(key, *, d_in, hidden_g, hidden_l, rnn_hidden, num_class):
  keys = jax.random.split(key, 9)
  p = {}
  p["w1"], p["b1"] = linear_params(keys[0], d_in, hidden_g)
  p["w2"], p["b2"] = linear_params(keys[1], 2, hidden_l)
  p["w3"], p["b3"] = linear_params(keys[2], hidden_g, hidden_g + hidden_l)
  p["w4"], p["b4"] = linear_params(keys[3], hidden_l, hidden_g + hidden_l)
  p["w_ih"], p["b_ih"] = linear_params(keys[4], hidden_g + hidden_l, rnn_hidden)
  p["w_hh"], p["b_hh"] = linear_params(keys[5], rnn_hidden, rnn_hidden)
  p["w_loc"], p["b_loc"] = linear_params(keys[6], rnn_hidden, 2)
  p["w_base"], p["b_base"] = linear_params(keys[7], rnn_hidden, 1)
  p["w_act"], p["b_act"] = linear_params(keys[8], rnn_hidden, num_class)
  return p


def prepare_kernel_params(p):
  """One-time prep: pre-fuse fc3|fc4, the RNN cell, and the three heads."""
  kp = {"w1": p["w1"], "b1": p["b1"], "w2": p["w2"], "b2": p["b2"]}
  kp["w34"] = jnp.concatenate([p["w3"], p["w4"]], axis=0)        # (Hg+Hl, Hg+Hl)
  kp["b34"] = p["b3"] + p["b4"]
  kp["w_core"] = jnp.concatenate([p["w_ih"], p["w_hh"]], axis=0)  # (Hg+Hl+H, H)
  kp["b_core"] = p["b_ih"] + p["b_hh"]
  kp["w_heads"] = jnp.concatenate([p["w_loc"], p["w_base"], p["w_act"]], axis=1)
  kp["b_heads"] = jnp.concatenate([p["b_loc"], p["b_base"], p["b_act"]], axis=1)
  return kp


# ---------------------------------------------------------------------------
# Pure-JAX reference for one RAM step (uses the un-fused parameters).
# ---------------------------------------------------------------------------
def ram_step_ref(glimpse, l_t, noise_t, h_prev, p, *, std):
  relu = lambda v: jnp.maximum(v, 0.0)
  what = relu(glimpse @ p["w1"] + p["b1"]) @ p["w3"] + p["b3"]
  where = relu(l_t @ p["w2"] + p["b2"]) @ p["w4"] + p["b4"]
  g_t = relu(what + where)
  h_t = relu(g_t @ p["w_ih"] + p["b_ih"] + h_prev @ p["w_hh"] + p["b_hh"])
  mu = jnp.tanh(h_t @ p["w_loc"] + p["b_loc"])
  l_new = jnp.tanh(mu + noise_t)
  baseline = relu(h_t @ p["w_base"] + p["b_base"])
  log_pi = jax.scipy.stats.norm.logpdf(l_new, loc=mu, scale=std).sum(
      axis=1, keepdims=True)
  log_probas = jax.nn.log_softmax(h_t @ p["w_act"] + p["b_act"], axis=1)
  return h_t, mu, l_new, baseline, log_pi, log_probas


if __name__ == "__main__":
  # Small config consistent with RAMNet(args.conv == False).
  batch = 2
  num_channels = 1
  img_size = 32
  patch_size = 8
  num_patches = 2
  glimpse_scale = 2
  hidden_g = 32            # glimpse_hidden
  hidden_l = 16            # loc_hidden
  rnn_hidden = 32
  num_class = 8
  num_glimpses = 3
  std = 0.25
  d_in = num_patches * patch_size * patch_size * num_channels   # 128 (lane-dense)

  key = jax.random.PRNGKey(0)
  k_param, k_img, k_loc, k_noise = jax.random.split(key, 4)

  params = init_params(k_param, d_in=d_in, hidden_g=hidden_g, hidden_l=hidden_l,
                       rnn_hidden=rnn_hidden, num_class=num_class)
  kparams = prepare_kernel_params(params)   # done ONCE, not per forward call

  x = jax.random.normal(k_img, (batch, num_channels, img_size, img_size),
                        dtype=jnp.float32)
  l_0 = jax.random.uniform(k_loc, (batch, 2), jnp.float32, -1.0, 1.0)
  # torch draws numpy Normal(0, std) noise each step; pre-draw it so the
  # kernel path and the reference use identical noise.
  noise = std * jax.random.normal(k_noise, (num_glimpses, batch, 2),
                                  dtype=jnp.float32)

  forward = jax.jit(functools.partial(
      ram_forward, num_glimpses=num_glimpses, patch_size=patch_size,
      num_patches=num_patches, scale=glimpse_scale, std=std,
      rnn_hidden=rnn_hidden))
  locs, baselines, log_pis, log_probas = jax.block_until_ready(
      forward(x, l_0, noise, kparams))

  # ---- shape checks (RAMNet.forward contract) ------------------------------
  assert len(locs) == num_glimpses and all(l.shape == (batch, 2) for l in locs)
  assert baselines.shape == (batch, num_glimpses)
  assert log_pis.shape == (batch, num_glimpses)
  assert log_probas.shape == (batch, num_class)
  assert jnp.allclose(jnp.sum(jnp.exp(log_probas), axis=1), 1.0, atol=1e-3)

  # ---- per-step numeric check vs. the pure-JAX reference -------------------
  # Teacher-forced on the kernel trajectory so the integer patch coordinates
  # are identical for both paths; tolerances allow for MXU-vs-XLA f32 matmul
  # lowering differences.
  tols = {"h_t": (5e-2, 5e-2), "mu": (5e-2, 5e-2), "l_t": (5e-2, 5e-2),
          "baseline": (5e-2, 5e-2), "log_pi": (2e-1, 5e-2),
          "log_probas": (5e-2, 5e-2)}
  names = ("h_t", "mu", "l_t", "baseline", "log_pi", "log_probas")
  h_cur = jnp.zeros((batch, rnn_hidden), jnp.float32)
  l_cur = l_0
  for t in range(num_glimpses):
    glimpse = foveate(x, l_cur, patch_size=patch_size,
                      num_patches=num_patches, scale=glimpse_scale)
    outs_k = ram_step(glimpse, l_cur, noise[t], h_cur, kparams, std=std)
    outs_r = ram_step_ref(glimpse, l_cur, noise[t], h_cur, params, std=std)
    for name, a, b in zip(names, outs_k, outs_r):
      atol, rtol = tols[name]
      assert a.shape == b.shape, f"step {t}: {name} shape {a.shape} vs {b.shape}"
      assert jnp.allclose(a, b, atol=atol, rtol=rtol), (
          f"step {t}: {name} mismatch, max abs err "
          f"{float(jnp.max(jnp.abs(a - b)))}")
    h_cur, l_cur = outs_k[0], outs_k[2]

  print("KERNEL_OK")
</pallas_src>

<mosaic_0001>
module attributes {stable_mosaic.version = 11 : i64} {
  func.func @ram_step_kernel(%arg0: i32, %arg1: memref<8x128xf32, #tpu.memory_space<vmem>>, %arg2: memref<8x2xf32, #tpu.memory_space<vmem>>, %arg3: memref<8x2xf32, #tpu.memory_space<vmem>>, %arg4: memref<8x32xf32, #tpu.memory_space<vmem>>, %arg5: memref<128x32xf32, #tpu.memory_space<vmem>>, %arg6: memref<1x32xf32, #tpu.memory_space<vmem>>, %arg7: memref<2x16xf32, #tpu.memory_space<vmem>>, %arg8: memref<1x16xf32, #tpu.memory_space<vmem>>, %arg9: memref<48x48xf32, #tpu.memory_space<vmem>>, %arg10: memref<1x48xf32, #tpu.memory_space<vmem>>, %arg11: memref<80x32xf32, #tpu.memory_space<vmem>>, %arg12: memref<1x32xf32, #tpu.memory_space<vmem>>, %arg13: memref<32x11xf32, #tpu.memory_space<vmem>>, %arg14: memref<1x11xf32, #tpu.memory_space<vmem>>, %arg15: memref<8x128xf32, #tpu.memory_space<vmem>>, %arg16: memref<8x48xf32, #tpu.memory_space<vmem>>, %arg17: memref<8x80xf32, #tpu.memory_space<vmem>>) attributes {dimension_semantics = [#tpu.dimension_semantics<parallel>], iteration_bounds = array<i64: 1>, scalar_prefetch = 0 : i64, scratch_operands = 2 : i64, tpu.core_type = #tpu.core_type<tc>, window_params = [{transform_indices = @transform_0, window_bounds = array<i64: 8, 128>}, {transform_indices = @transform_1, window_bounds = array<i64: 8, 2>}, {transform_indices = @transform_2, window_bounds = array<i64: 8, 2>}, {transform_indices = @transform_3, window_bounds = array<i64: 8, 32>}, {pipeline_mode = #tpu.pipeline_mode<synchronous>, transform_indices = @transform_4, window_bounds = array<i64: 128, 32>}, {pipeline_mode = #tpu.pipeline_mode<synchronous>, transform_indices = @transform_5, window_bounds = array<i64: 1, 32>}, {pipeline_mode = #tpu.pipeline_mode<synchronous>, transform_indices = @transform_6, window_bounds = array<i64: 2, 16>}, {pipeline_mode = #tpu.pipeline_mode<synchronous>, transform_indices = @transform_7, window_bounds = array<i64: 1, 16>}, {pipeline_mode = #tpu.pipeline_mode<synchronous>, transform_indices = @transform_8, window_bounds = array<i64: 48, 48>}, {pipeline_mode = #tpu.pipeline_mode<synchronous>, transform_indices = @transform_9, window_bounds = array<i64: 1, 48>}, {pipeline_mode = #tpu.pipeline_mode<synchronous>, transform_indices = @transform_10, window_bounds = array<i64: 80, 32>}, {pipeline_mode = #tpu.pipeline_mode<synchronous>, transform_indices = @transform_11, window_bounds = array<i64: 1, 32>}, {pipeline_mode = #tpu.pipeline_mode<synchronous>, transform_indices = @transform_12, window_bounds = array<i64: 32, 11>}, {pipeline_mode = #tpu.pipeline_mode<synchronous>, transform_indices = @transform_13, window_bounds = array<i64: 1, 11>}, {transform_indices = @transform_14, window_bounds = array<i64: 8, 128>}]} {
    %c0 = arith.constant 0 : index
    %c0_0 = arith.constant 0 : index
    %0 = vector.load %arg1[%c0, %c0_0] : memref<8x128xf32, #tpu.memory_space<vmem>>, vector<8x128xf32>
    %c0_1 = arith.constant 0 : index
    %c0_2 = arith.constant 0 : index
    %1 = vector.load %arg5[%c0_1, %c0_2] : memref<128x32xf32, #tpu.memory_space<vmem>>, vector<128x32xf32>
    %cst = arith.constant dense<0.000000e+00> : vector<8x32xf32>
    %2 = tpu.matmul %0, %1, %cst {dimension_numbers = #tpu.dot_dimension_numbers<[1], [0], [0], [1], [0, 0, 1, 1], [], []>} : vector<8x128xf32>, vector<128x32xf32>, vector<8x32xf32> -> vector<8x32xf32>
    %c0_3 = arith.constant 0 : index
    %c0_4 = arith.constant 0 : index
    %3 = vector.load %arg6[%c0_3, %c0_4] : memref<1x32xf32, #tpu.memory_space<vmem>>, vector<1x32xf32>
    %4 = vector.broadcast %3 : vector<1x32xf32> to vector<8x32xf32>
    %5 = arith.addf %2, %4 : vector<8x32xf32>
    %c0_5 = arith.constant 0 : index
    %c0_6 = arith.constant 0 : index
    %6 = vector.load %arg2[%c0_5, %c0_6] : memref<8x2xf32, #tpu.memory_space<vmem>>, vector<8x2xf32>
    %c0_7 = arith.constant 0 : index
    %c0_8 = arith.constant 0 : index
    %7 = vector.load %arg7[%c0_7, %c0_8] : memref<2x16xf32, #tpu.memory_space<vmem>>, vector<2x16xf32>
    %8 = vector.extract_strided_slice %6 {offsets = [0, 0], sizes = [8, 1], strides = [1, 1]} : vector<8x2xf32> to vector<8x1xf32>
    %9 = vector.extract_strided_slice %7 {offsets = [0, 0], sizes = [1, 16], strides = [1, 1]} : vector<2x16xf32> to vector<1x16xf32>
    %10 = vector.broadcast %8 : vector<8x1xf32> to vector<8x16xf32>
    %11 = vector.broadcast %9 : vector<1x16xf32> to vector<8x16xf32>
    %12 = arith.mulf %10, %11 : vector<8x16xf32>
    %13 = vector.extract_strided_slice %6 {offsets = [0, 1], sizes = [8, 1], strides = [1, 1]} : vector<8x2xf32> to vector<8x1xf32>
    %14 = vector.extract_strided_slice %7 {offsets = [1, 0], sizes = [1, 16], strides = [1, 1]} : vector<2x16xf32> to vector<1x16xf32>
    %15 = vector.broadcast %13 : vector<8x1xf32> to vector<8x16xf32>
    %16 = vector.broadcast %14 : vector<1x16xf32> to vector<8x16xf32>
    %17 = arith.mulf %15, %16 : vector<8x16xf32>
    %18 = arith.addf %12, %17 : vector<8x16xf32>
    %c0_9 = arith.constant 0 : index
    %c0_10 = arith.constant 0 : index
    %19 = vector.load %arg8[%c0_9, %c0_10] : memref<1x16xf32, #tpu.memory_space<vmem>>, vector<1x16xf32>
    %20 = vector.broadcast %19 : vector<1x16xf32> to vector<8x16xf32>
    %21 = arith.addf %18, %20 : vector<8x16xf32>
    %cst_11 = arith.constant 0.000000e+00 : f32
    %22 = vector.broadcast %cst_11 : f32 to vector<8x32xf32>
    %23 = arith.maximumf %5, %22 : vector<8x32xf32>
    %c0_12 = arith.constant 0 : index
    %c0_13 = arith.constant 0 : index
    %24 = vector.load %arg16[%c0_12, %c0_13] : memref<8x48xf32, #tpu.memory_space<vmem>>, vector<8x32xf32>
    tpu.vector_store %arg16[%c0_12, %c0_13], %23 {strides = array<i32>} : memref<8x48xf32, #tpu.memory_space<vmem>>, vector<8x32xf32>,
    %cst_14 = arith.constant 0.000000e+00 : f32
    %25 = vector.broadcast %cst_14 : f32 to vector<8x16xf32>
    %26 = arith.maximumf %21, %25 : vector<8x16xf32>
    %c0_15 = arith.constant 0 : index
    %c32 = arith.constant 32 : index
    %27 = vector.load %arg16[%c0_15, %c32] : memref<8x48xf32, #tpu.memory_space<vmem>>, vector<8x16xf32>
    tpu.vector_store %arg16[%c0_15, %c32], %26 {strides = array<i32>} : memref<8x48xf32, #tpu.memory_space<vmem>>, vector<8x16xf32>,
    %c0_16 = arith.constant 0 : index
    %c0_17 = arith.constant 0 : index
    %28 = vector.load %arg16[%c0_16, %c0_17] : memref<8x48xf32, #tpu.memory_space<vmem>>, vector<8x48xf32>
    %c0_18 = arith.constant 0 : index
    %c0_19 = arith.constant 0 : index
    %29 = vector.load %arg9[%c0_18, %c0_19] : memref<48x48xf32, #tpu.memory_space<vmem>>, vector<48x48xf32>
    %cst_20 = arith.constant dense<0.000000e+00> : vector<8x48xf32>
    %30 = tpu.matmul %28, %29, %cst_20 {dimension_numbers = #tpu.dot_dimension_numbers<[1], [0], [0], [1], [0, 0, 1, 1], [], []>} : vector<8x48xf32>, vector<48x48xf32>, vector<8x48xf32> -> vector<8x48xf32>
    %c0_21 = arith.constant 0 : index
    %c0_22 = arith.constant 0 : index
    %31 = vector.load %arg10[%c0_21, %c0_22] : memref<1x48xf32, #tpu.memory_space<vmem>>, vector<1x48xf32>
    %32 = vector.broadcast %31 : vector<1x48xf32> to vector<8x48xf32>
    %33 = arith.addf %30, %32 : vector<8x48xf32>
    %cst_23 = arith.constant 0.000000e+00 : f32
    %34 = vector.broadcast %cst_23 : f32 to vector<8x48xf32>
    %35 = arith.maximumf %33, %34 : vector<8x48xf32>
    %c0_24 = arith.constant 0 : index
    %c0_25 = arith.constant 0 : index
    %36 = vector.load %arg17[%c0_24, %c0_25] : memref<8x80xf32, #tpu.memory_space<vmem>>, vector<8x48xf32>
    tpu.vector_store %arg17[%c0_24, %c0_25], %35 {strides = array<i32>} : memref<8x80xf32, #tpu.memory_space<vmem>>, vector<8x48xf32>,
    %c0_26 = arith.constant 0 : index
    %c0_27 = arith.constant 0 : index
    %37 = vector.load %arg4[%c0_26, %c0_27] : memref<8x32xf32, #tpu.memory_space<vmem>>, vector<8x32xf32>
    %c0_28 = arith.constant 0 : index
    %c48 = arith.constant 48 : index
    %38 = vector.load %arg17[%c0_28, %c48] : memref<8x80xf32, #tpu.memory_space<vmem>>, vector<8x32xf32>
    tpu.vector_store %arg17[%c0_28, %c48], %37 {strides = array<i32>} : memref<8x80xf32, #tpu.memory_space<vmem>>, vector<8x32xf32>,
    %c0_29 = arith.constant 0 : index
    %c0_30 = arith.constant 0 : index
    %39 = vector.load %arg17[%c0_29, %c0_30] : memref<8x80xf32, #tpu.memory_space<vmem>>, vector<8x80xf32>
    %c0_31 = arith.constant 0 : index
    %c0_32 = arith.constant 0 : index
    %40 = vector.load %arg11[%c0_31, %c0_32] : memref<80x32xf32, #tpu.memory_space<vmem>>, vector<80x32xf32>
    %cst_33 = arith.constant dense<0.000000e+00> : vector<8x32xf32>
    %41 = tpu.matmul %39, %40, %cst_33 {dimension_numbers = #tpu.dot_dimension_numbers<[1], [0], [0], [1], [0, 0, 1, 1], [], []>} : vector<8x80xf32>, vector<80x32xf32>, vector<8x32xf32> -> vector<8x32xf32>
    %c0_34 = arith.constant 0 : index
    %c0_35 = arith.constant 0 : index
    %42 = vector.load %arg12[%c0_34, %c0_35] : memref<1x32xf32, #tpu.memory_space<vmem>>, vector<1x32xf32>
    %43 = vector.broadcast %42 : vector<1x32xf32> to vector<8x32xf32>
    %44 = arith.addf %41, %43 : vector<8x32xf32>
    %cst_36 = arith.constant 0.000000e+00 : f32
    %45 = vector.broadcast %cst_36 : f32 to vector<8x32xf32>
    %46 = arith.maximumf %44, %45 : vector<8x32xf32>
    %c0_37 = arith.constant 0 : index
    %c0_38 = arith.constant 0 : index
    %47 = vector.load %arg13[%c0_37, %c0_38] : memref<32x11xf32, #tpu.memory_space<vmem>>, vector<32x11xf32>
    %cst_39 = arith.constant dense<0.000000e+00> : vector<8x11xf32>
    %48 = tpu.matmul %46, %47, %cst_39 {dimension_numbers = #tpu.dot_dimension_numbers<[1], [0], [0], [1], [0, 0, 1, 1], [], []>} : vector<8x32xf32>, vector<32x11xf32>, vector<8x11xf32> -> vector<8x11xf32>
    %c0_40 = arith.constant 0 : index
    %c0_41 = arith.constant 0 : index
    %49 = vector.load %arg14[%c0_40, %c0_41] : memref<1x11xf32, #tpu.memory_space<vmem>>, vector<1x11xf32>
    %50 = vector.broadcast %49 : vector<1x11xf32> to vector<8x11xf32>
    %51 = arith.addf %48, %50 : vector<8x11xf32>
    %52 = vector.extract_strided_slice %51 {offsets = [0, 0], sizes = [8, 2], strides = [1, 1]} : vector<8x11xf32> to vector<8x2xf32>
    %53 = math.tanh %52 : vector<8x2xf32>
    %54 = vector.extract_strided_slice %51 {offsets = [0, 2], sizes = [8, 1], strides = [1, 1]} : vector<8x11xf32> to vector<8x1xf32>
    %cst_42 = arith.constant 0.000000e+00 : f32
    %55 = vector.broadcast %cst_42 : f32 to vector<8x1xf32>
    %56 = arith.maximumf %54, %55 : vector<8x1xf32>
    %57 = vector.extract_strided_slice %51 {offsets = [0, 3], sizes = [8, 8], strides = [1, 1]} : vector<8x11xf32> to vector<8x8xf32>
    %c0_43 = arith.constant 0 : index
    %c0_44 = arith.constant 0 : index
    %58 = vector.load %arg3[%c0_43, %c0_44] : memref<8x2xf32, #tpu.memory_space<vmem>>, vector<8x2xf32>
    %59 = arith.addf %53, %58 : vector<8x2xf32>
    %60 = math.tanh %59 : vector<8x2xf32>
    %61 = arith.subf %60, %53 : vector<8x2xf32>
    %cst_45 = arith.constant 4.000000e+00 : f32
    %62 = vector.broadcast %cst_45 : f32 to vector<8x2xf32>
    %63 = arith.mulf %61, %62 : vector<8x2xf32>
    %cst_46 = arith.constant -5.000000e-01 : f32
    %64 = vector.broadcast %cst_46 : f32 to vector<8x2xf32>
    %65 = arith.mulf %64, %63 : vector<8x2xf32>
    %66 = arith.mulf %65, %63 : vector<8x2xf32>
    %cst_47 = arith.constant 0.467355818 : f32
    %67 = vector.broadcast %cst_47 : f32 to vector<8x2xf32>
    %68 = arith.addf %66, %67 : vector<8x2xf32>
    %cst_48 = arith.constant dense<0.000000e+00> : vector<8xf32>
    %69 = vector.multi_reduction <add>, %68, %cst_48 [1] : vector<8x2xf32> to vector<8xf32>
    %70 = vector.shape_cast %69 : vector<8xf32> to vector<8x1xf32>
    %cst_49 = arith.constant dense<0xFF800000> : vector<8xf32>
    %71 = vector.multi_reduction <maximumf>, %57, %cst_49 [1] : vector<8x8xf32> to vector<8xf32>
    %72 = vector.shape_cast %71 : vector<8xf32> to vector<8x1xf32>
    %73 = vector.broadcast %72 : vector<8x1xf32> to vector<8x8xf32>
    %74 = arith.subf %57, %73 : vector<8x8xf32>
    %75 = math.exp %74 : vector<8x8xf32>
    %cst_50 = arith.constant dense<0.000000e+00> : vector<8xf32>
    %76 = vector.multi_reduction <add>, %75, %cst_50 [1] : vector<8x8xf32> to vector<8xf32>
    %77 = vector.shape_cast %76 : vector<8xf32> to vector<8x1xf32>
    %78 = math.log %77 : vector<8x1xf32>
    %cst_51 = arith.constant 0.000000e+00 : f32
    %79 = vector.broadcast %cst_51 : f32 to vector<8x128xf32>
    %c0_52 = arith.constant 0 : index
    %c0_53 = arith.constant 0 : index
    %80 = vector.load %arg15[%c0_52, %c0_53] : memref<8x128xf32, #tpu.memory_space<vmem>>, vector<8x128xf32>
    tpu.vector_store %arg15[%c0_52, %c0_53], %79 {strides = array<i32>} : memref<8x128xf32, #tpu.memory_space<vmem>>, vector<8x128xf32>,
    %c0_54 = arith.constant 0 : index
    %c0_55 = arith.constant 0 : index
    %81 = vector.load %arg15[%c0_54, %c0_55] : memref<8x128xf32, #tpu.memory_space<vmem>>, vector<8x32xf32>
    tpu.vector_store %arg15[%c0_54, %c0_55], %46 {strides = array<i32>} : memref<8x128xf32, #tpu.memory_space<vmem>>, vector<8x32xf32>,
    %c0_56 = arith.constant 0 : index
    %c32_57 = arith.constant 32 : index
    %82 = vector.load %arg15[%c0_56, %c32_57] : memref<8x128xf32, #tpu.memory_space<vmem>>, vector<8x2xf32>
    tpu.vector_store %arg15[%c0_56, %c32_57], %53 {strides = array<i32>} : memref<8x128xf32, #tpu.memory_space<vmem>>, vector<8x2xf32>,
    %c0_58 = arith.constant 0 : index
    %c34 = arith.constant 34 : index
    %83 = vector.load %arg15[%c0_58, %c34] : memref<8x128xf32, #tpu.memory_space<vmem>>, vector<8x2xf32>
    tpu.vector_store %arg15[%c0_58, %c34], %60 {strides = array<i32>} : memref<8x128xf32, #tpu.memory_space<vmem>>, vector<8x2xf32>,
    %c0_59 = arith.constant 0 : index
    %c36 = arith.constant 36 : index
    %84 = vector.load %arg15[%c0_59, %c36] : memref<8x128xf32, #tpu.memory_space<vmem>>, vector<8x1xf32>
    tpu.vector_store %arg15[%c0_59, %c36], %56 {strides = array<i32>} : memref<8x128xf32, #tpu.memory_space<vmem>>, vector<8x1xf32>,
    %c0_60 = arith.constant 0 : index
    %c37 = arith.constant 37 : index
    %85 = vector.load %arg15[%c0_60, %c37] : memref<8x128xf32, #tpu.memory_space<vmem>>, vector<8x1xf32>
    tpu.vector_store %arg15[%c0_60, %c37], %70 {strides = array<i32>} : memref<8x128xf32, #tpu.memory_space<vmem>>, vector<8x1xf32>,
    %86 = vector.broadcast %78 : vector<8x1xf32> to vector<8x8xf32>
    %87 = arith.subf %74, %86 : vector<8x8xf32>
    %c0_61 = arith.constant 0 : index
    %c38 = arith.constant 38 : index
    %88 = vector.load %arg15[%c0_61, %c38] : memref<8x128xf32, #tpu.memory_space<vmem>>, vector<8x8xf32>
    tpu.vector_store %arg15[%c0_61, %c38], %87 {strides = array<i32>} : memref<8x128xf32, #tpu.memory_space<vmem>>, vector<8x8xf32>,
    return
  }
  func.func @transform_0(%arg0: i32) -> (i32, i32) {
    %c0_i32 = arith.constant 0 : i32
    %c0_i32_0 = arith.constant 0 : i32
    return %arg0, %c0_i32 : i32, i32
  }
  func.func @transform_1(%arg0: i32) -> (i32, i32) {
    %c0_i32 = arith.constant 0 : i32
    %c0_i32_0 = arith.constant 0 : i32
    return %arg0, %c0_i32 : i32, i32
  }
  func.func @transform_2(%arg0: i32) -> (i32, i32) {
    %c0_i32 = arith.constant 0 : i32
    %c0_i32_0 = arith.constant 0 : i32
    return %arg0, %c0_i32 : i32, i32
  }
  func.func @transform_3(%arg0: i32) -> (i32, i32) {
    %c0_i32 = arith.constant 0 : i32
    %c0_i32_0 = arith.constant 0 : i32
    return %arg0, %c0_i32 : i32, i32
  }
  func.func @transform_4(%arg0: i32) -> (i32, i32) {
    %c0_i32 = arith.constant 0 : i32
    %c0_i32_0 = arith.constant 0 : i32
    %c0_i32_1 = arith.constant 0 : i32
    return %c0_i32, %c0_i32_0 : i32, i32
  }
  func.func @transform_5(%arg0: i32) -> (i32, i32) {
    %c0_i32 = arith.constant 0 : i32
    %c0_i32_0 = arith.constant 0 : i32
    %c0_i32_1 = arith.constant 0 : i32
    return %c0_i32, %c0_i32_0 : i32, i32
  }
  func.func @transform_6(%arg0: i32) -> (i32, i32) {
    %c0_i32 = arith.constant 0 : i32
    %c0_i32_0 = arith.constant 0 : i32
    %c0_i32_1 = arith.constant 0 : i32
    return %c0_i32, %c0_i32_0 : i32, i32
  }
  func.func @transform_7(%arg0: i32) -> (i32, i32) {
    %c0_i32 = arith.constant 0 : i32
    %c0_i32_0 = arith.constant 0 : i32
    %c0_i32_1 = arith.constant 0 : i32
    return %c0_i32, %c0_i32_0 : i32, i32
  }
  func.func @transform_8(%arg0: i32) -> (i32, i32) {
    %c0_i32 = arith.constant 0 : i32
    %c0_i32_0 = arith.constant 0 : i32
    %c0_i32_1 = arith.constant 0 : i32
    return %c0_i32, %c0_i32_0 : i32, i32
  }
  func.func @transform_9(%arg0: i32) -> (i32, i32) {
    %c0_i32 = arith.constant 0 : i32
    %c0_i32_0 = arith.constant 0 : i32
    %c0_i32_1 = arith.constant 0 : i32
    return %c0_i32, %c0_i32_0 : i32, i32
  }
  func.func @transform_10(%arg0: i32) -> (i32, i32) {
    %c0_i32 = arith.constant 0 : i32
    %c0_i32_0 = arith.constant 0 : i32
    %c0_i32_1 = arith.constant 0 : i32
    return %c0_i32, %c0_i32_0 : i32, i32
  }
  func.func @transform_11(%arg0: i32) -> (i32, i32) {
    %c0_i32 = arith.constant 0 : i32
    %c0_i32_0 = arith.constant 0 : i32
    %c0_i32_1 = arith.constant 0 : i32
    return %c0_i32, %c0_i32_0 : i32, i32
  }
  func.func @transform_12(%arg0: i32) -> (i32, i32) {
    %c0_i32 = arith.constant 0 : i32
    %c0_i32_0 = arith.constant 0 : i32
    %c0_i32_1 = arith.constant 0 : i32
    return %c0_i32, %c0_i32_0 : i32, i32
  }
  func.func @transform_13(%arg0: i32) -> (i32, i32) {
    %c0_i32 = arith.constant 0 : i32
    %c0_i32_0 = arith.constant 0 : i32
    %c0_i32_1 = arith.constant 0 : i32
    return %c0_i32, %c0_i32_0 : i32, i32
  }
  func.func @transform_14(%arg0: i32) -> (i32, i32) {
    %c0_i32 = arith.constant 0 : i32
    %c0_i32_0 = arith.constant 0 : i32
    return %arg0, %c0_i32 : i32, i32
  }
}

</mosaic_0001>

<llo_original>
// kernel: ram_forward.3
$region0: #{ram_forward.3}
  #allocation0 [shape = 'u32[]', space=smem, size = 0x4, offset = 0x4, fixed_abs, tag = 'smem constant byte address 0x4 - core index']
  #allocation1 [shape = 'u32[144,128]{1,0:T(1,128)}', space=vmem, size = 0x12000, scoped, tag = 'internal scratch']
  #allocation2 [shape = 'f32[8,48]{1,0:T(8,128)}', space=vmem, size = 0x1000, scoped, tag = 'scratch operand']
  #allocation3 [shape = 'f32[8,80]{1,0:T(8,128)}', space=vmem, size = 0x1000, scoped, tag = 'scratch operand']
  %s0 = inlined_call_operand.vmem [shape: f32[8,128], index: 0, kind: input, shape index: {}]
  %s1 = inlined_call_operand.vmem [shape: f32[8,2], index: 1, kind: input, shape index: {}]
  %s2 = inlined_call_operand.vmem [shape: f32[8,2], index: 2, kind: input, shape index: {}]
  %s3 = inlined_call_operand.vmem [shape: f32[8,32], index: 3, kind: input, shape index: {}]
  %s4 = inlined_call_operand.vmem [shape: f32[128,32], index: 4, kind: input, shape index: {}]
  %s5 = inlined_call_operand.vmem [shape: f32[1,32], index: 5, kind: input, shape index: {}]
  %s6 = inlined_call_operand.vmem [shape: f32[2,16], index: 6, kind: input, shape index: {}]
  %s7 = inlined_call_operand.vmem [shape: f32[1,16], index: 7, kind: input, shape index: {}]
  %s8 = inlined_call_operand.vmem [shape: f32[48,48], index: 8, kind: input, shape index: {}]
  %s9 = inlined_call_operand.vmem [shape: f32[1,48], index: 9, kind: input, shape index: {}]
  %s10 = inlined_call_operand.vmem [shape: f32[80,32], index: 10, kind: input, shape index: {}]
  %s11 = inlined_call_operand.vmem [shape: f32[1,32], index: 11, kind: input, shape index: {}]
  %s12 = inlined_call_operand.vmem [shape: f32[32,11], index: 12, kind: input, shape index: {}]
  %s13 = inlined_call_operand.vmem [shape: f32[1,11], index: 13, kind: input, shape index: {}]
  %s14 = inlined_call_operand.vmem [shape: f32[8,128], index: 14, kind: output, shape index: {}]
  %s15 = sld [smem:[#allocation0]]
  $region66: #{ram_forward.3} parent=0
    _
  %s17 = ssub.s32 1, %s15
  %s18 = scalar_select 0, %s17, %s15
  // Predicated region
  $region2: #{ram_forward.3} parent=0 // pred_check
    _
  $region3: #{ram_forward.3} parent=0 // pred_check_branch
    %20 = sbr.rel (0) target = $region5
  $region4: #{ram_forward.3} parent=0 // pred_region
    _
  $region5: #{ram_forward.3} parent=0 // pred_fallthru
    _
  // Predicated region
  $region6: #{ram_forward.3} parent=0 // pred_check
    _
  $region7: #{ram_forward.3} parent=0 // pred_check_branch
    %22 = sbr.rel (0) target = $region9
  $region8: #{ram_forward.3} parent=0 // pred_region
    _
  $region9: #{ram_forward.3} parent=0 // pred_fallthru
    _
  // Predicated region
  $region10: #{ram_forward.3} parent=0 // pred_check
    _
  $region11: #{ram_forward.3} parent=0 // pred_check_branch
    %24 = sbr.rel (0) target = $region13
  $region12: #{ram_forward.3} parent=0 // pred_region
    _
  $region13: #{ram_forward.3} parent=0 // pred_fallthru
    _
  // Predicated region
  $region14: #{ram_forward.3} parent=0 // pred_check
    _
  $region15: #{ram_forward.3} parent=0 // pred_check_branch
    %26 = sbr.rel (0) target = $region17
  $region16: #{ram_forward.3} parent=0 // pred_region
    _
  $region17: #{ram_forward.3} parent=0 // pred_fallthru
    _
  // Predicated region
  $region18: #{ram_forward.3} parent=0 // pred_check
    _
  $region19: #{ram_forward.3} parent=0 // pred_check_branch
    %28 = sbr.rel (0) target = $region21
  $region20: #{ram_forward.3} parent=0 // pred_region
    _
  $region21: #{ram_forward.3} parent=0 // pred_fallthru
    _
  // Predicated region
  $region22: #{ram_forward.3} parent=0 // pred_check
    _
  $region23: #{ram_forward.3} parent=0 // pred_check_branch
    %30 = sbr.rel (0) target = $region25
  $region24: #{ram_forward.3} parent=0 // pred_region
    _
  $region25: #{ram_forward.3} parent=0 // pred_fallthru
    _
  // Predicated region
  $region26: #{ram_forward.3} parent=0 // pred_check
    _
  $region27: #{ram_forward.3} parent=0 // pred_check_branch
    %32 = sbr.rel (0) target = $region29
  $region28: #{ram_forward.3} parent=0 // pred_region
    _
  $region29: #{ram_forward.3} parent=0 // pred_fallthru
    _
  // Predicated region
  $region30: #{ram_forward.3} parent=0 // pred_check
    _
  $region31: #{ram_forward.3} parent=0 // pred_check_branch
    %34 = sbr.rel (0) target = $region33
  $region32: #{ram_forward.3} parent=0 // pred_region
    _
  $region33: #{ram_forward.3} parent=0 // pred_fallthru
    _
  // Predicated region
  $region34: #{ram_forward.3} parent=0 // pred_check
    _
  $region35: #{ram_forward.3} parent=0 // pred_check_branch
    %36 = sbr.rel (0) target = $region37
  $region36: #{ram_forward.3} parent=0 // pred_region
    _
  $region37: #{ram_forward.3} parent=0 // pred_fallthru
    _
  // Predicated region
  $region38: #{ram_forward.3} parent=0 // pred_check
    _
  $region39: #{ram_forward.3} parent=0 // pred_check_branch
    %38 = sbr.rel (0) target = $region41
  $region40: #{ram_forward.3} parent=0 // pred_region
    _
  $region41: #{ram_forward.3} parent=0 // pred_fallthru
    _
  // Predicated region
  $region42: #{ram_forward.3} parent=0 // pred_check
    _
  $region43: #{ram_forward.3} parent=0 // pred_check_branch
    %40 = sbr.rel (0) target = $region45
  $region44: #{ram_forward.3} parent=0 // pred_region
    _
  $region45: #{ram_forward.3} parent=0 // pred_fallthru
    _
  // Predicated region
  $region46: #{ram_forward.3} parent=0 // pred_check
    _
  $region47: #{ram_forward.3} parent=0 // pred_check_branch
    %42 = sbr.rel (0) target = $region49
  $region48: #{ram_forward.3} parent=0 // pred_region
    _
  $region49: #{ram_forward.3} parent=0 // pred_fallthru
    _
  // Predicated region
  $region50: #{ram_forward.3} parent=0 // pred_check
    _
  $region51: #{ram_forward.3} parent=0 // pred_check_branch
    %44 = sbr.rel (0) target = $region53
  $region52: #{ram_forward.3} parent=0 // pred_region
    _
  $region53: #{ram_forward.3} parent=0 // pred_fallthru
    _
  // Predicated region
  $region54: #{ram_forward.3} parent=0 // pred_check
    _
  $region55: #{ram_forward.3} parent=0 // pred_check_branch
    %46 = sbr.rel (0) target = $region57
  $region56: #{ram_forward.3} parent=0 // pred_region
    _
  $region57: #{ram_forward.3} parent=0 // pred_fallthru
    _
  %v47 = vld [vmem:[%s0] sm:$0xff]
  %v48 = vld [vmem:[%s4] sm:$0xff]
  %v49 = vld [vmem:[%s4 + $0x8] sm:$0xff]
  %v50 = vld [vmem:[%s4 + $0x10] sm:$0xff]
  %v51 = vld [vmem:[%s4 + $0x18] sm:$0xff]
  %v52 = vld [vmem:[%s4 + $0x20] sm:$0xff]
  %v53 = vld [vmem:[%s4 + $0x28] sm:$0xff]
  %v54 = vld [vmem:[%s4 + $0x30] sm:$0xff]
  %v55 = vld [vmem:[%s4 + $0x38] sm:$0xff]
  %v56 = vld [vmem:[%s4 + $0x40] sm:$0xff]
  %v57 = vld [vmem:[%s4 + $0x48] sm:$0xff]
  %v58 = vld [vmem:[%s4 + $0x50] sm:$0xff]
  %v59 = vld [vmem:[%s4 + $0x58] sm:$0xff]
  %v60 = vld [vmem:[%s4 + $0x60] sm:$0xff]
  %v61 = vld [vmem:[%s4 + $0x68] sm:$0xff]
  %v62 = vld [vmem:[%s4 + $0x70] sm:$0xff]
  %v63 = vld [vmem:[%s4 + $0x78] sm:$0xff]
  %v64 = vld [vmem:[%s5] sm:$0x1]
  %v66 = vlaneseq
  %v67 = vshrl.u32 %v66, 7
  %v68 = vsub.s32 0, %v67
  %v69 = vrot.slane %v64, %v68
  %71 = vmatprep.subr.mxu0 0.0
  %72 = vmatpush1.msra.mxu0 %v48
  %73 = vmatprep.subr.mxu0 0.0
  %74 = vmatpush1.msra.mxu0 %v49
  %75 = vmatprep.subr.mxu0 0.0
  %76 = vmatpush1.msra.mxu0 %v50
  %77 = vmatprep.subr.mxu0 0.0
  %78 = vmatpush1.msra.mxu0 %v51
  %79 = vmatprep.subr.mxu0 0.0
  %80 = vmatpush1.msra.mxu0 %v52
  %81 = vmatprep.subr.mxu0 0.0
  %82 = vmatpush1.msra.mxu0 %v53
  %83 = vmatprep.subr.mxu0 0.0
  %84 = vmatpush1.msra.mxu0 %v54
  %85 = vmatprep.subr.mxu0 0.0
  %86 = vmatpush1.msra.mxu0 %v55
  %87 = vmatprep.subr.mxu0 0.0
  %88 = vmatpush1.msra.mxu0 %v56
  %89 = vmatprep.subr.mxu0 0.0
  %90 = vmatpush1.msra.mxu0 %v57
  %91 = vmatprep.subr.mxu0 0.0
  %92 = vmatpush1.msra.mxu0 %v58
  %93 = vmatprep.subr.mxu0 0.0
  %94 = vmatpush1.msra.mxu0 %v59
  %95 = vmatprep.subr.mxu0 0.0
  %96 = vmatpush1.msra.mxu0 %v60
  %97 = vmatprep.subr.mxu0 0.0
  %98 = vmatpush1.msra.mxu0 %v61
  %99 = vmatprep.subr.mxu0 0.0
  %100 = vmatpush1.msra.mxu0 %v62
  %101 = vmatprep.subr.mxu0 0.0
  %102 = vmatpush1.msra.mxu0 %v63
  %103 = vmatprep.subr.mxu0 0.0
  %104 = vmatpush1.msra.mxu0 0.0
  %105 = vmatprep.subr.mxu0 0.0
  %106 = vmatpush1.msra.mxu0 0.0
  %107 = vmatprep.subr.mxu0 0.0
  %108 = vmatpush1.msra.mxu0 0.0
  %109 = vmatprep.subr.mxu0 0.0
  %110 = vmatpush1.msra.mxu0 0.0
  %111 = vmatprep.subr.mxu0 0.0
  %112 = vmatpush1.msra.mxu0 0.0
  %113 = vmatprep.subr.mxu0 0.0
  %114 = vmatpush1.msra.mxu0 0.0
  %115 = vmatprep.subr.mxu0 0.0
  %116 = vmatpush1.msra.mxu0 0.0
  %117 = vmatprep.subr.mxu0 0.0
  %118 = vmatpush1.msra.mxu0 0.0
  %119 = vmatprep.subr.mxu0 0.0
  %120 = vmatpush1.msra.mxu0 0.0
  %121 = vmatprep.subr.mxu0 0.0
  %122 = vmatpush1.msra.mxu0 0.0
  %123 = vmatprep.subr.mxu0 0.0
  %124 = vmatpush1.msra.mxu0 0.0
  %125 = vmatprep.subr.mxu0 0.0
  %126 = vmatpush1.msra.mxu0 0.0
  %127 = vmatprep.subr.mxu0 0.0
  %128 = vmatpush1.msra.mxu0 0.0
  %129 = vmatprep.subr.mxu0 0.0
  %130 = vmatpush1.msra.mxu0 0.0
  %131 = vmatprep.subr.mxu0 0.0
  %132 = vmatpush1.msra.mxu0 0.0
  %133 = vmatprep.subr.mxu0 0.0
  %134 = vmatpush1.msra.mxu0 0.0
  %135 = vmatprep.mubr.f32.mxu0 0.0
  %136 = vmatmul.mubr.f32.gmra.mrb[0].mxu0 %v47
  %v137 = vpop.f32.mrb[0].mxu0
  %v138 = vadd.f32 %v69, %v137
  %v139 = vpop.f32.mrb[0].mxu0
  %140 = vdwg.mxu0
  %v141 = vld [vmem:[%s1] sm:$0xff]
  %v142 = vld [vmem:[%s6] sm:$0x3]
  %144 = vset.pattern.permute.xlu0 0
  %145 = vperm.xlu0 %144, %v141
  %v146 = vpop.permute.xlu0 %145
  %v148 = vlaneseq
  %v149 = vshrl.u32 %v148, 7
  %v150 = vsub.s32 0, %v149
  %v151 = vrot.slane %v142, %v150
  %v152 = vmul.f32 %v146, %v151
  %153 = vset.pattern.permute.xlu0 1
  %154 = vperm.xlu0 %153, %v141
  %v155 = vpop.permute.xlu0 %154
  %v157 = vlaneseq
  %v158 = vshrl.u32 %v157, 7
  %v159 = vsub.s32 1, %v158
  %v160 = vrot.slane %v142, %v159
  %v161 = vmul.f32 %v155, %v160
  %v162 = vadd.f32 %v152, %v161
  %v163 = vld [vmem:[%s7] sm:$0x1]
  %v165 = vlaneseq
  %v166 = vshrl.u32 %v165, 7
  %v167 = vsub.s32 0, %v166
  %v168 = vrot.slane %v163, %v167
  %v170 = vadd.f32 %v162, %v168
  %v171 = vmax.f32 %v138, 0.0
  %vm172 = vcmask 261120
  %173 = vst.msk [vmem:[#allocation2] sm:$0xff] %vm172, %v171
  %v174 = vmax.f32 %v170, 0.0
  %176 = vrot.lane.b32.xlu0 %v174, 32
  %v177 = vpop.permute.xlu0 %176
  %vm179 = vcmask 392448
  %180 = vst.msk [vmem:[#allocation2] sm:$0xff] %vm179, %v177
  %v181 = vld [vmem:[#allocation2] sm:$0xff]
  %v182 = vld [vmem:[%s8] sm:$0xff]
  %v183 = vld [vmem:[%s8 + $0x8] sm:$0xff]
  %v184 = vld [vmem:[%s8 + $0x10] sm:$0xff]
  %v185 = vld [vmem:[%s8 + $0x18] sm:$0xff]
  %v186 = vld [vmem:[%s8 + $0x20] sm:$0xff]
  %v187 = vld [vmem:[%s8 + $0x28] sm:$0xff]
  %v188 = vld [vmem:[%s9] sm:$0x1]
  %v190 = vlaneseq
  %v191 = vshrl.u32 %v190, 7
  %v192 = vsub.s32 0, %v191
  %v193 = vrot.slane %v188, %v192
  %vm195 = vcmask 392192
  %v197 = vsel %vm195, %v181, 0
  %199 = vmatprep.subr.mxu0 0.0
  %200 = vmatpush1.msra.mxu0 %v182
  %201 = vmatprep.subr.mxu0 0.0
  %202 = vmatpush1.msra.mxu0 %v183
  %203 = vmatprep.subr.mxu0 0.0
  %204 = vmatpush1.msra.mxu0 %v184
  %205 = vmatprep.subr.mxu0 0.0
  %206 = vmatpush1.msra.mxu0 %v185
  %207 = vmatprep.subr.mxu0 0.0
  %208 = vmatpush1.msra.mxu0 %v186
  %209 = vmatprep.subr.mxu0 0.0
  %210 = vmatpush1.msra.mxu0 %v187
  %211 = vmatprep.subr.mxu0 0.0
  %212 = vmatpush1.msra.mxu0 0.0
  %213 = vmatprep.subr.mxu0 0.0
  %214 = vmatpush1.msra.mxu0 0.0
  %215 = vmatprep.subr.mxu0 0.0
  %216 = vmatpush1.msra.mxu0 0.0
  %217 = vmatprep.subr.mxu0 0.0
  %218 = vmatpush1.msra.mxu0 0.0
  %219 = vmatprep.subr.mxu0 0.0
  %220 = vmatpush1.msra.mxu0 0.0
  %221 = vmatprep.subr.mxu0 0.0
  %222 = vmatpush1.msra.mxu0 0.0
  %223 = vmatprep.subr.mxu0 0.0
  %224 = vmatpush1.msra.mxu0 0.0
  %225 = vmatprep.subr.mxu0 0.0
  %226 = vmatpush1.msra.mxu0 0.0
  %227 = vmatprep.subr.mxu0 0.0
  %228 = vmatpush1.msra.mxu0 0.0
  %229 = vmatprep.subr.mxu0 0.0
  %230 = vmatpush1.msra.mxu0 0.0
  %231 = vmatprep.subr.mxu0 0.0
  %232 = vmatpush1.msra.mxu0 0.0
  %233 = vmatprep.subr.mxu0 0.0
  %234 = vmatpush1.msra.mxu0 0.0
  %235 = vmatprep.subr.mxu0 0.0
  %236 = vmatpush1.msra.mxu0 0.0
  %237 = vmatprep.subr.mxu0 0.0
  %238 = vmatpush1.msra.mxu0 0.0
  %239 = vmatprep.subr.mxu0 0.0
  %240 = vmatpush1.msra.mxu0 0.0
  %241 = vmatprep.subr.mxu0 0.0
  %242 = vmatpush1.msra.mxu0 0.0
  %243 = vmatprep.subr.mxu0 0.0
  %244 = vmatpush1.msra.mxu0 0.0
  %245 = vmatprep.subr.mxu0 0.0
  %246 = vmatpush1.msra.mxu0 0.0
  %247 = vmatprep.subr.mxu0 0.0
  %248 = vmatpush1.msra.mxu0 0.0
  %249 = vmatprep.subr.mxu0 0.0
  %250 = vmatpush1.msra.mxu0 0.0
  %251 = vmatprep.subr.mxu0 0.0
  %252 = vmatpush1.msra.mxu0 0.0
  %253 = vmatprep.subr.mxu0 0.0
  %254 = vmatpush1.msra.mxu0 0.0
  %255 = vmatprep.subr.mxu0 0.0
  %256 = vmatpush1.msra.mxu0 0.0
  %257 = vmatprep.subr.mxu0 0.0
  %258 = vmatpush1.msra.mxu0 0.0
  %259 = vmatprep.subr.mxu0 0.0
  %260 = vmatpush1.msra.mxu0 0.0
  %261 = vmatprep.subr.mxu0 0.0
  %262 = vmatpush1.msra.mxu0 0.0
  %263 = vmatprep.mubr.f32.mxu0 0.0
  %264 = vmatmul.mubr.f32.gmra.mrb[0].mxu0 %v197
  %v265 = vpop.f32.mrb[0].mxu0
  %v266 = vadd.f32 %v193, %v265
  %v267 = vpop.f32.mrb[0].mxu0
  %268 = vdwg.mxu0
  %v269 = vmax.f32 %v266, 0.0
  %270 = vst.msk [vmem:[#allocation3] sm:$0xff] %vm195, %v269
  %v271 = vld [vmem:[%s3] sm:$0xff]
  %273 = vrot.lane.b32.xlu0 %v271, 48
  %v274 = vpop.permute.xlu0 %273
  %vm276 = vcmask 654720
  %277 = vst.msk [vmem:[#allocation3] sm:$0xff] %vm276, %v274
  %v278 = vld [vmem:[#allocation3] sm:$0xff]
  %v279 = vld [vmem:[%s10] sm:$0xff]
  %v280 = vld [vmem:[%s10 + $0x8] sm:$0xff]
  %v281 = vld [vmem:[%s10 + $0x10] sm:$0xff]
  %v282 = vld [vmem:[%s10 + $0x18] sm:$0xff]
  %v283 = vld [vmem:[%s10 + $0x20] sm:$0xff]
  %v284 = vld [vmem:[%s10 + $0x28] sm:$0xff]
  %v285 = vld [vmem:[%s10 + $0x30] sm:$0xff]
  %v286 = vld [vmem:[%s10 + $0x38] sm:$0xff]
  %v287 = vld [vmem:[%s10 + $0x40] sm:$0xff]
  %v288 = vld [vmem:[%s10 + $0x48] sm:$0xff]
  %v289 = vld [vmem:[%s11] sm:$0x1]
  %v291 = vlaneseq
  %v292 = vshrl.u32 %v291, 7
  %v293 = vsub.s32 0, %v292
  %v294 = vrot.slane %v289, %v293
  %vm296 = vcmask 654336
  %v298 = vsel %vm296, %v278, 0
  %300 = vmatprep.subr.mxu0 0.0
  %301 = vmatpush1.msra.mxu0 %v279
  %302 = vmatprep.subr.mxu0 0.0
  %303 = vmatpush1.msra.mxu0 %v280
  %304 = vmatprep.subr.mxu0 0.0
  %305 = vmatpush1.msra.mxu0 %v281
  %306 = vmatprep.subr.mxu0 0.0
  %307 = vmatpush1.msra.mxu0 %v282
  %308 = vmatprep.subr.mxu0 0.0
  %309 = vmatpush1.msra.mxu0 %v283
  %310 = vmatprep.subr.mxu0 0.0
  %311 = vmatpush1.msra.mxu0 %v284
  %312 = vmatprep.subr.mxu0 0.0
  %313 = vmatpush1.msra.mxu0 %v285
  %314 = vmatprep.subr.mxu0 0.0
  %315 = vmatpush1.msra.mxu0 %v286
  %316 = vmatprep.subr.mxu0 0.0
  %317 = vmatpush1.msra.mxu0 %v287
  %318 = vmatprep.subr.mxu0 0.0
  %319 = vmatpush1.msra.mxu0 %v288
  %320 = vmatprep.subr.mxu0 0.0
  %321 = vmatpush1.msra.mxu0 0.0
  %322 = vmatprep.subr.mxu0 0.0
  %323 = vmatpush1.msra.mxu0 0.0
  %324 = vmatprep.subr.mxu0 0.0
  %325 = vmatpush1.msra.mxu0 0.0
  %326 = vmatprep.subr.mxu0 0.0
  %327 = vmatpush1.msra.mxu0 0.0
  %328 = vmatprep.subr.mxu0 0.0
  %329 = vmatpush1.msra.mxu0 0.0
  %330 = vmatprep.subr.mxu0 0.0
  %331 = vmatpush1.msra.mxu0 0.0
  %332 = vmatprep.subr.mxu0 0.0
  %333 = vmatpush1.msra.mxu0 0.0
  %334 = vmatprep.subr.mxu0 0.0
  %335 = vmatpush1.msra.mxu0 0.0
  %336 = vmatprep.subr.mxu0 0.0
  %337 = vmatpush1.msra.mxu0 0.0
  %338 = vmatprep.subr.mxu0 0.0
  %339 = vmatpush1.msra.mxu0 0.0
  %340 = vmatprep.subr.mxu0 0.0
  %341 = vmatpush1.msra.mxu0 0.0
  %342 = vmatprep.subr.mxu0 0.0
  %343 = vmatpush1.msra.mxu0 0.0
  %344 = vmatprep.subr.mxu0 0.0
  %345 = vmatpush1.msra.mxu0 0.0
  %346 = vmatprep.subr.mxu0 0.0
  %347 = vmatpush1.msra.mxu0 0.0
  %348 = vmatprep.subr.mxu0 0.0
  %349 = vmatpush1.msra.mxu0 0.0
  %350 = vmatprep.subr.mxu0 0.0
  %351 = vmatpush1.msra.mxu0 0.0
  %352 = vmatprep.subr.mxu0 0.0
  %353 = vmatpush1.msra.mxu0 0.0
  %354 = vmatprep.subr.mxu0 0.0
  %355 = vmatpush1.msra.mxu0 0.0
  %356 = vmatprep.subr.mxu0 0.0
  %357 = vmatpush1.msra.mxu0 0.0
  %358 = vmatprep.subr.mxu0 0.0
  %359 = vmatpush1.msra.mxu0 0.0
  %360 = vmatprep.subr.mxu0 0.0
  %361 = vmatpush1.msra.mxu0 0.0
  %362 = vmatprep.subr.mxu0 0.0
  %363 = vmatpush1.msra.mxu0 0.0
  %364 = vmatprep.mubr.f32.mxu0 0.0
  %365 = vmatmul.mubr.f32.gmra.mrb[0].mxu0 %v298
  %v366 = vpop.f32.mrb[0].mxu0
  %v367 = vadd.f32 %v294, %v366
  %v368 = vpop.f32.mrb[0].mxu0
  %369 = vdwg.mxu0
  %v370 = vmax.f32 %v367, 0.0
  %v371 = vld [vmem:[%s12] sm:$0xff]
  %v372 = vld [vmem:[%s12 + $0x8] sm:$0xff]
  %v373 = vld [vmem:[%s12 + $0x10] sm:$0xff]
  %v374 = vld [vmem:[%s12 + $0x18] sm:$0xff]
  %v375 = vld [vmem:[%s13] sm:$0x1]
  %v377 = vlaneseq
  %v378 = vshrl.u32 %v377, 7
  %v379 = vsub.s32 0, %v378
  %v380 = vrot.slane %v375, %v379
  %v383 = vsel %vm172, %v370, 0
  %385 = vmatprep.subr.mxu0 0.0
  %386 = vmatpush1.msra.mxu0 %v371
  %387 = vmatprep.subr.mxu0 0.0
  %388 = vmatpush1.msra.mxu0 %v372
  %389 = vmatprep.subr.mxu0 0.0
  %390 = vmatpush1.msra.mxu0 %v373
  %391 = vmatprep.subr.mxu0 0.0
  %392 = vmatpush1.msra.mxu0 %v374
  %393 = vmatprep.subr.mxu0 0.0
  %394 = vmatpush1.msra.mxu0 0.0
  %395 = vmatprep.subr.mxu0 0.0
  %396 = vmatpush1.msra.mxu0 0.0
  %397 = vmatprep.subr.mxu0 0.0
  %398 = vmatpush1.msra.mxu0 0.0
  %399 = vmatprep.subr.mxu0 0.0
  %400 = vmatpush1.msra.mxu0 0.0
  %401 = vmatprep.subr.mxu0 0.0
  %402 = vmatpush1.msra.mxu0 0.0
  %403 = vmatprep.subr.mxu0 0.0
  %404 = vmatpush1.msra.mxu0 0.0
  %405 = vmatprep.subr.mxu0 0.0
  %406 = vmatpush1.msra.mxu0 0.0
  %407 = vmatprep.subr.mxu0 0.0
  %408 = vmatpush1.msra.mxu0 0.0
  %409 = vmatprep.subr.mxu0 0.0
  %410 = vmatpush1.msra.mxu0 0.0
  %411 = vmatprep.subr.mxu0 0.0
  %412 = vmatpush1.msra.mxu0 0.0
  %413 = vmatprep.subr.mxu0 0.0
  %414 = vmatpush1.msra.mxu0 0.0
  %415 = vmatprep.subr.mxu0 0.0
  %416 = vmatpush1.msra.mxu0 0.0
  %417 = vmatprep.subr.mxu0 0.0
  %418 = vmatpush1.msra.mxu0 0.0
  %419 = vmatprep.subr.mxu0 0.0
  %420 = vmatpush1.msra.mxu0 0.0
  %421 = vmatprep.subr.mxu0 0.0
  %422 = vmatpush1.msra.mxu0 0.0
  %423 = vmatprep.subr.mxu0 0.0
  %424 = vmatpush1.msra.mxu0 0.0
  %425 = vmatprep.subr.mxu0 0.0
  %426 = vmatpush1.msra.mxu0 0.0
  %427 = vmatprep.subr.mxu0 0.0
  %428 = vmatpush1.msra.mxu0 0.0
  %429 = vmatprep.subr.mxu0 0.0
  %430 = vmatpush1.msra.mxu0 0.0
  %431 = vmatprep.subr.mxu0 0.0
  %432 = vmatpush1.msra.mxu0 0.0
  %433 = vmatprep.subr.mxu0 0.0
  %434 = vmatpush1.msra.mxu0 0.0
  %435 = vmatprep.subr.mxu0 0.0
  %436 = vmatpush1.msra.mxu0 0.0
  %437 = vmatprep.subr.mxu0 0.0
  %438 = vmatpush1.msra.mxu0 0.0
  %439 = vmatprep.subr.mxu0 0.0
  %440 = vmatpush1.msra.mxu0 0.0
  %441 = vmatprep.subr.mxu0 0.0
  %442 = vmatpush1.msra.mxu0 0.0
  %443 = vmatprep.subr.mxu0 0.0
  %444 = vmatpush1.msra.mxu0 0.0
  %445 = vmatprep.subr.mxu0 0.0
  %446 = vmatpush1.msra.mxu0 0.0
  %447 = vmatprep.subr.mxu0 0.0
  %448 = vmatpush1.msra.mxu0 0.0
  %449 = vmatprep.mubr.f32.mxu0 0.0
  %450 = vmatmul.mubr.f32.gmra.mrb[0].mxu0 %v383
  %v451 = vpop.f32.mrb[0].mxu0
  %v452 = vadd.f32 %v380, %v451
  %v453 = vpop.f32.mrb[0].mxu0
  %454 = vdwg.mxu0
  %v455 = vtanh.pop %v452
  %v456 = vmax.f32 %v452, 0.0
  %v457 = vld [vmem:[%s2] sm:$0xff]
  %v458 = vadd.f32 %v455, %v457
  %v459 = vtanh.pop %v458
  %v460 = vsub.f32 %v459, %v455
  %v461 = vmul.f32 %v460, 4.0
  %v462 = vmul.f32 %v461, -0.5
  %v463 = vmul.f32 %v462, %v461
  %v464 = vadd.f32 %v463, 0.46735582
  %vm465 = vcmask 15360
  %v466 = vsel %vm465, %v464, 0.0
  %467 = vadd.xlane.f32.xlu0 %v466
  %v468 = vpop.xlane.xlu0 %467
  %vm469 = vcmask 89112
  %v470 = vsel %vm469, %v452, -inf
  %471 = vmax.xlane.f32.xlu0 %v470
  %v472 = vpop.xlane.xlu0 %471
  %v473 = vsub.f32 %v452, %v472
  %v474 = vmul.f32 %v473, 1.442695
  %v475 = vpow.pop %v474
  %477 = vrot.lane.b32.xlu0 %v475, 125
  %v478 = vpop.permute.xlu0 %477
  %vm480 = vcmask 64512
  %v481 = vsel %vm480, %v478, 0.0
  %482 = vadd.xlane.f32.xlu0 %v481
  %v483 = vpop.xlane.xlu0 %482
  %v484 = vlog2.pop %v483
  %v485 = vmul.f32 %v484, 0.6931472
  %486 = vst [vmem:[%s14] sm:$0xff] 0.0
  %487 = vst.msk [vmem:[%s14] sm:$0xff] %vm172, %v370
  %489 = vrot.lane.b32.xlu0 %v455, 32
  %v490 = vpop.permute.xlu0 %489
  %vm492 = vcmask 277760
  %493 = vst.msk [vmem:[%s14] sm:$0xff] %vm492, %v490
  %495 = vrot.lane.b32.xlu0 %v459, 34
  %v496 = vpop.permute.xlu0 %495
  %vm498 = vcmask 294160
  %499 = vst.msk [vmem:[%s14] sm:$0xff] %vm498, %v496
  %501 = vrot.lane.b32.xlu0 %v456, 34
  %v502 = vpop.permute.xlu0 %501
  %vm504 = vcmask 302368
  %505 = vst.msk [vmem:[%s14] sm:$0xff] %vm504, %v502
  %vm506 = vcmask 310568
  %507 = vst.msk [vmem:[%s14] sm:$0xff] %vm506, %v468
  %v508 = vsub.f32 %v473, %v485
  %510 = vrot.lane.b32.xlu0 %v508, 35
  %v511 = vpop.permute.xlu0 %510
  %vm513 = vcmask 376112
  %514 = vst.msk [vmem:[%s14] sm:$0xff] %vm513, %v511
  // Predicated region
  $region58: #{ram_forward.3} parent=0 // pred_check
    _
  $region59: #{ram_forward.3} parent=0 // pred_check_branch
    %516 = sbr.rel (0) target = $region61
  $region60: #{ram_forward.3} parent=0 // pred_region
    _
  $region61: #{ram_forward.3} parent=0 // pred_fallthru
    _
  // Predicated region
  $region62: #{ram_forward.3} parent=0 // pred_check
    _
  $region63: #{ram_forward.3} parent=0 // pred_check_branch
    %518 = sbr.rel (0) target = $region65
  $region64: #{ram_forward.3} parent=0 // pred_region
    _
  $region65: #{ram_forward.3} parent=0 // pred_fallthru
    _

</llo_original>
